<compile_context>
chip_gen: v6e
topology: v6e:2x2x1
jax: 0.10.0
libtpu: 0.0.40
codegen_flags: <defaults>
</compile_context>

<pallas_src>
import functools

import jax
import jax.numpy as jnp
import numpy as np
from jax.experimental import pallas as pl
from jax.experimental.pallas import tpu as pltpu


def _round_up(x, m):
    return ((x + m - 1) // m) * m


def _ngram_block_kernel(step_ref, cur_ref, tokens_ref, lprobs_ref, out_ref,
                        t_scr, mm_ref, *, ngram, vocab_tile, k_max):
    """One (row_block, vocab_tile) tile of lprobs."""
    j = pl.program_id(1)
    step = step_ref[0]                                   # SMEM scalar (decode step)
    num_starts = jnp.clip(step - ngram + 2, 0, k_max)    # valid n-gram start positions

    # ---- once per row block (j == 0): cache the per-row match summary ----------
    @pl.when(j == 0)
    def _summarize():
        toks = tokens_ref[...]                           # (RB, seq_len) int32
        rb = toks.shape[0]
        k_iota = jax.lax.broadcasted_iota(jnp.int32, (rb, k_max), 1)
        ok = k_iota < num_starts                         # all-False when num_starts <= 0
        for i in range(ngram - 1):                       # ngram is small & static
            ok = jnp.logical_and(ok, toks[:, i:i + k_max] == cur_ref[:, i:i + 1])
        banned = toks[:, ngram - 1:ngram - 1 + k_max]    # (RB, k_max)
        t_eff = jnp.where(ok, banned, -1)                # -1 == "nothing banned"
        t_scr[...] = t_eff
        big = jnp.int32(2 ** 30)
        mm_ref[0] = jnp.min(jnp.where(ok, banned, big))  # min banned id (BIG if none)
        mm_ref[1] = jnp.max(t_eff)                       # max banned id (-1 if none)

    # ---- per vocab tile: cheap scalar range test against the cached summary ----
    vocab_base = j * vocab_tile
    gmin = mm_ref[0]
    gmax = mm_ref[1]
    hit = jnp.logical_and(gmax >= vocab_base, gmin < vocab_base + vocab_tile)

    @pl.when(hit)
    def _ban():
        out_ref[...] = lprobs_ref[...]
        t_local = t_scr[...] - vocab_base                                 # (RB, k_max)
        k_iota = jax.lax.broadcasted_iota(jnp.int32, t_local.shape, 1)
        lane = jax.lax.broadcasted_iota(jnp.int32, out_ref.shape, 1)
        neg_inf = jnp.array(-jnp.inf, dtype=out_ref.dtype)

        def body(k, carry):
            # column k of the banned-id table; -1 (or out-of-tile ids) never match a lane
            t_k = jnp.sum(jnp.where(k_iota == k, t_local, 0), axis=1, keepdims=True)
            out_ref[...] = jnp.where(lane == t_k, neg_inf, out_ref[...])
            return carry

        jax.lax.fori_loop(0, num_starts, body, 0)

    @pl.when(jnp.logical_not(hit))
    def _copy():
        # nothing banned in this vocab tile: pure load -> store (HBM-bandwidth floor)
        out_ref[...] = lprobs_ref[...]


def _pick_row_block(rows):
    # Prefer >=2 row blocks so the "parallel" row axis can shard across v7x's 2 TCs.
    for cand in (64, 32, 16, 8):
        if rows % cand == 0 and rows // cand >= 2:
            return cand
    return rows                         # full-extent fallback (small decode batches)


def _pick_vocab_tile(vocab, row_block, itemsize, target_bytes=2 << 20, max_tile=16384):
    # ~2 MiB lprobs blocks: large enough to amortize the ~0.35us/grid-step overhead
    # (>=85% of HBM roofline), small enough that in+out double-buffering (~4x block)
    # stays far below v5e's 16 MiB default scoped VMEM and v7x's 64 MiB physical VMEM.
    cap = max(128, min(max_tile, target_bytes // max(1, row_block * itemsize)))
    cap = (cap // 128) * 128
    return int(min(cap, _round_up(vocab, 128)))


def ngram_repeat_block(tokens, lprobs, bsz, step, beam_size, no_repeat_ngram_size,
                       *, vocab_tile=None, row_block=None):
    """JAX/Pallas equivalent of NGramRepeatBlock.forward."""
    rows, seq_len = tokens.shape
    rows_l, vocab = lprobs.shape
    assert rows == bsz * beam_size
    assert rows_l == bsz * beam_size

    ngram = int(no_repeat_ngram_size)
    k_max = seq_len - ngram + 1
    if ngram <= 0 or k_max <= 0:
        return lprobs                    # no complete n-gram can exist yet

    itemsize = jnp.dtype(lprobs.dtype).itemsize
    tokens = tokens.astype(jnp.int32)
    step_arr = jnp.asarray(step, dtype=jnp.int32).reshape(1)

    # Hoist the current (n-1)-gram out of the kernel: one clamped dynamic_slice here
    # replaces (ngram-1) masked XLU lane-reductions that were redone per vocab tile.
    ng1 = max(ngram - 1, 1)
    start = jnp.clip(jnp.asarray(step, jnp.int32) - (ngram - 2), 0, seq_len - ng1)
    cur_gram = jax.lax.dynamic_slice(tokens, (jnp.int32(0), start), (rows, ng1))

    if row_block is None:
        row_block = _pick_row_block(rows)
    row_block = int(row_block)
    if rows % row_block != 0 or (row_block % 8 != 0 and row_block != rows):
        row_block = rows                 # safety fallback (full-extent block)

    if vocab_tile is None:
        vocab_tile = _pick_vocab_tile(vocab, row_block, itemsize)
    vocab_tile = int(_round_up(int(vocab_tile), 128))
    vocab_pad = _round_up(vocab, vocab_tile)     # pad so the lane-dense tile divides vocab

    lprobs_in = lprobs
    if vocab_pad != vocab:
        lprobs_in = jnp.pad(lprobs, ((0, 0), (0, vocab_pad - vocab)))

    grid = (rows // row_block, vocab_pad // vocab_tile)

    # Explicit scoped-VMEM budget (double-buffered in + out blocks, tokens, scratch).
    block_bytes = row_block * vocab_tile * itemsize
    tok_bytes = row_block * seq_len * 4
    scr_bytes = row_block * _round_up(k_max, 128) * 4
    vmem_limit = int(min(max(4 * block_bytes + 4 * tok_bytes + scr_bytes + (2 << 20),
                             32 << 20), 48 << 20))

    kernel = functools.partial(_ngram_block_kernel, ngram=ngram,
                               vocab_tile=vocab_tile, k_max=k_max)

    out = pl.pallas_call(
        kernel,
        out_shape=jax.ShapeDtypeStruct((rows, vocab_pad), lprobs.dtype),
        grid_spec=pltpu.PrefetchScalarGridSpec(
            num_scalar_prefetch=1,
            grid=grid,
            in_specs=[
                # cur_gram / tokens blocks stay resident across the vocab axis
                pl.BlockSpec((row_block, ng1), lambda i, j, step_ref: (i, 0)),
                pl.BlockSpec((row_block, seq_len), lambda i, j, step_ref: (i, 0)),
                pl.BlockSpec((row_block, vocab_tile), lambda i, j, step_ref: (i, j)),
            ],
            out_specs=pl.BlockSpec((row_block, vocab_tile),
                                   lambda i, j, step_ref: (i, j)),
            scratch_shapes=[
                pltpu.VMEM((row_block, k_max), jnp.int32),  # cached banned ids (t_eff)
                pltpu.SMEM((2,), jnp.int32),                # [min, max] banned id
            ],
        ),
        compiler_params=pltpu.CompilerParams(
            dimension_semantics=("parallel", "arbitrary"),
            vmem_limit_bytes=vmem_limit),
        # call args: (step, cur_gram, tokens, lprobs) -> lprobs (index 3) aliases output 0
        input_output_aliases={3: 0},
    )(step_arr, cur_gram, tokens, lprobs_in)

    if vocab_pad != vocab:
        out = out[:, :vocab]
    return out
    # TODO(synk): a fully sparse in-place variant (pl.ANY lprobs + per-ban DMA patching)
    # would avoid sweeping rows x vocab entirely; out of scope for this self-contained demo.


def _reference(tokens, lprobs, bsz, step, beam_size, n):
    tokens = np.asarray(tokens)
    out = np.array(lprobs, copy=True)
    num_starts = step - n + 2
    if num_starts <= 0:
        return out
    for r in range(bsz * beam_size):
        cur = tokens[r, step - n + 2: step + 1]
        for k in range(num_starts):
            if np.array_equal(tokens[r, k:k + n - 1], cur):
                out[r, tokens[r, k + n - 1]] = -np.inf
    return out


if __name__ == "__main__":
    bsz, beam_size = 4, 4
    rows = bsz * beam_size            # 16 -> two row blocks of 8
    seq_len = 16
    vocab = 1024
    no_repeat_ngram_size = 3

    key = jax.random.PRNGKey(0)
    k_tok, k_lp = jax.random.split(key)

    # Small per-row alphabets offset into different vocab tiles so bans land in
    # several (row_block, vocab_tile) grid cells.
    base = jax.random.randint(k_tok, (rows, seq_len), 0, 6, dtype=jnp.int32)
    offsets = (jnp.arange(rows, dtype=jnp.int32) % 4) * 260
    tokens = base + offsets[:, None]
    # Force guaranteed repeated n-grams in rows of both row blocks / several tiles.
    tokens = tokens.at[0, 14:16].set(tokens[0, 3:5])
    tokens = tokens.at[3, 14:16].set(tokens[3, 0:2])
    tokens = tokens.at[9, 14:16].set(tokens[9, 5:7])
    tokens = tokens.at[12, 14:16].set(tokens[12, 2:4])

    lprobs = jax.nn.log_softmax(
        jax.random.normal(k_lp, (rows, vocab), dtype=jnp.float32), axis=-1)

    tokens_np = np.asarray(tokens)
    lprobs_np = np.asarray(lprobs)

    # Same compiled kernel for every decode step (step is a runtime scalar).
    for step in (1, 2, 9, 15):
        out = jax.block_until_ready(
            ngram_repeat_block(tokens, lprobs, bsz, step, beam_size,
                               no_repeat_ngram_size, vocab_tile=256))
        ref = _reference(tokens_np, lprobs_np, bsz, step, beam_size,
                         no_repeat_ngram_size)
        np.testing.assert_allclose(np.asarray(out), ref, rtol=0, atol=0)

    # Auto tile-selection path.
    out = jax.block_until_ready(
        ngram_repeat_block(tokens, lprobs, bsz, 15, beam_size, no_repeat_ngram_size))
    np.testing.assert_allclose(
        np.asarray(out),
        _reference(tokens_np, lprobs_np, bsz, 15, beam_size, no_repeat_ngram_size),
        rtol=0, atol=0)

    # Odd (non multiple-of-128) vocab exercises the lane-padding path.
    vocab_odd = 1000
    lprobs_odd = lprobs[:, :vocab_odd]
    out = jax.block_until_ready(
        ngram_repeat_block(tokens, lprobs_odd, bsz, 15, beam_size,
                           no_repeat_ngram_size))
    np.testing.assert_allclose(
        np.asarray(out),
        _reference(tokens_np, np.asarray(lprobs_odd), bsz, 15, beam_size,
                   no_repeat_ngram_size),
        rtol=0, atol=0)

    print("KERNEL_OK")
</pallas_src>

<mosaic_0001>
module attributes {stable_mosaic.version = 11 : i64} {
  func.func @_ngram_block_kernel(%arg0: i32, %arg1: i32, %arg2: memref<1xi32, #tpu.memory_space<smem>>, %arg3: memref<8x2xi32, #tpu.memory_space<vmem>>, %arg4: memref<8x16xi32, #tpu.memory_space<vmem>>, %arg5: memref<8x256xf32, #tpu.memory_space<vmem>>, %arg6: memref<8x256xf32, #tpu.memory_space<vmem>>, %arg7: memref<8x14xi32, #tpu.memory_space<vmem>>, %arg8: memref<2xi32, #tpu.memory_space<smem>>) attributes {dimension_semantics = [#tpu.dimension_semantics<parallel>, #tpu.dimension_semantics<arbitrary>], iteration_bounds = array<i64: 2, 4>, scalar_prefetch = 1 : i64, scratch_operands = 2 : i64, tpu.core_type = #tpu.core_type<tc>, window_params = [{transform_indices = @transform_0, window_bounds = array<i64: 8, 2>}, {transform_indices = @transform_1, window_bounds = array<i64: 8, 16>}, {transform_indices = @transform_2, window_bounds = array<i64: 8, 256>}, {transform_indices = @transform_3, window_bounds = array<i64: 8, 256>}]} {
    %c0 = arith.constant 0 : index
    %0 = memref.load %arg2[%c0] : memref<1xi32, #tpu.memory_space<smem>>
    %c3_i32 = arith.constant 3 : i32
    %1 = arith.subi %0, %c3_i32 : i32
    %c2_i32 = arith.constant 2 : i32
    %2 = arith.addi %1, %c2_i32 : i32
    %c0_i32 = arith.constant 0 : i32
    %c14_i32 = arith.constant 14 : i32
    %3 = arith.maxsi %c0_i32, %2 : i32
    %4 = arith.minsi %c14_i32, %3 : i32
    %c0_i32_0 = arith.constant 0 : i32
    %5 = arith.cmpi eq, %arg1, %c0_i32_0 : i32
    %6 = arith.extui %5 : i1 to i32
    %c0_i32_1 = arith.constant 0 : i32
    %7 = arith.cmpi ne, %6, %c0_i32_1 : i32
    scf.if %7 {
      %c0_6 = arith.constant 0 : index
      %c0_7 = arith.constant 0 : index
      %20 = vector.load %arg4[%c0_6, %c0_7] : memref<8x16xi32, #tpu.memory_space<vmem>>, vector<8x16xi32>
      %21 = tpu.iota {dimensions = array<i32: 1>} : vector<8x14xi32>
      %22 = vector.broadcast %4 : i32 to vector<8x14xi32>
      %23 = arith.cmpi slt, %21, %22 : vector<8x14xi32>
      %24 = vector.extract_strided_slice %20 {offsets = [0, 0], sizes = [8, 14], strides = [1, 1]} : vector<8x16xi32> to vector<8x14xi32>
      %c0_8 = arith.constant 0 : index
      %c0_9 = arith.constant 0 : index
      %25 = vector.load %arg3[%c0_8, %c0_9] : memref<8x2xi32, #tpu.memory_space<vmem>>, vector<8x1xi32>
      %26 = vector.broadcast %25 : vector<8x1xi32> to vector<8x14xi32>
      %27 = arith.cmpi eq, %24, %26 : vector<8x14xi32>
      %28 = arith.andi %23, %27 : vector<8x14xi1>
      %29 = vector.extract_strided_slice %20 {offsets = [0, 1], sizes = [8, 14], strides = [1, 1]} : vector<8x16xi32> to vector<8x14xi32>
      %c0_10 = arith.constant 0 : index
      %c1_11 = arith.constant 1 : index
      %30 = vector.load %arg3[%c0_10, %c1_11] : memref<8x2xi32, #tpu.memory_space<vmem>>, vector<8x1xi32>
      %31 = vector.broadcast %30 : vector<8x1xi32> to vector<8x14xi32>
      %32 = arith.cmpi eq, %29, %31 : vector<8x14xi32>
      %33 = arith.andi %28, %32 : vector<8x14xi1>
      %34 = vector.extract_strided_slice %20 {offsets = [0, 2], sizes = [8, 14], strides = [1, 1]} : vector<8x16xi32> to vector<8x14xi32>
      %c-1_i32 = arith.constant -1 : i32
      %35 = vector.broadcast %c-1_i32 : i32 to vector<8x14xi32>
      %36 = arith.select %33, %34, %35 : vector<8x14xi1>, vector<8x14xi32>
      %c0_12 = arith.constant 0 : index
      %c0_13 = arith.constant 0 : index
      %37 = vector.load %arg7[%c0_12, %c0_13] : memref<8x14xi32, #tpu.memory_space<vmem>>, vector<8x14xi32>
      tpu.vector_store %arg7[%c0_12, %c0_13], %36 {strides = array<i32>} : memref<8x14xi32, #tpu.memory_space<vmem>>, vector<8x14xi32>,
      %c1073741824_i32 = arith.constant 1073741824 : i32
      %38 = vector.broadcast %c1073741824_i32 : i32 to vector<8x14xi32>
      %39 = arith.select %33, %34, %38 : vector<8x14xi1>, vector<8x14xi32>
      %40 = vector.shape_cast %39 : vector<8x14xi32> to vector<1x8x14xi32>
      %cst = arith.constant dense<2147483647> : vector<1xi32>
      %41 = vector.multi_reduction <minsi>, %40, %cst [1, 2] : vector<1x8x14xi32> to vector<1xi32>
      %42 = vector.shape_cast %41 : vector<1xi32> to vector<1x1x1xi32>
      %43 = vector.extract %42[0, 0, 0] : i32 from vector<1x1x1xi32>
      %c0_14 = arith.constant 0 : index
      %44 = memref.load %arg8[%c0_14] : memref<2xi32, #tpu.memory_space<smem>>
      memref.store %43, %arg8[%c0_14] : memref<2xi32, #tpu.memory_space<smem>>
      %45 = vector.shape_cast %36 : vector<8x14xi32> to vector<1x8x14xi32>
      %cst_15 = arith.constant dense<-2147483648> : vector<1xi32>
      %46 = vector.multi_reduction <maxsi>, %45, %cst_15 [1, 2] : vector<1x8x14xi32> to vector<1xi32>
      %47 = vector.shape_cast %46 : vector<1xi32> to vector<1x1x1xi32>
      %48 = vector.extract %47[0, 0, 0] : i32 from vector<1x1x1xi32>
      %c1_16 = arith.constant 1 : index
      %49 = memref.load %arg8[%c1_16] : memref<2xi32, #tpu.memory_space<smem>>
      memref.store %48, %arg8[%c1_16] : memref<2xi32, #tpu.memory_space<smem>>
    } else {
    }
    %c256_i32 = arith.constant 256 : i32
    %8 = arith.muli %arg1, %c256_i32 : i32
    %c0_2 = arith.constant 0 : index
    %9 = memref.load %arg8[%c0_2] : memref<2xi32, #tpu.memory_space<smem>>
    %c1 = arith.constant 1 : index
    %10 = memref.load %arg8[%c1] : memref<2xi32, #tpu.memory_space<smem>>
    %11 = arith.cmpi sge, %10, %8 : i32
    %c256_i32_3 = arith.constant 256 : i32
    %12 = arith.addi %8, %c256_i32_3 : i32
    %13 = arith.cmpi slt, %9, %12 : i32
    %14 = arith.andi %11, %13 : i1
    %15 = arith.extui %14 : i1 to i32
    %c0_i32_4 = arith.constant 0 : i32
    %16 = arith.cmpi ne, %15, %c0_i32_4 : i32
    scf.if %16 {
      %c0_6 = arith.constant 0 : index
      %c0_7 = arith.constant 0 : index
      %20 = vector.load %arg5[%c0_6, %c0_7] : memref<8x256xf32, #tpu.memory_space<vmem>>, vector<8x256xf32>
      %c0_8 = arith.constant 0 : index
      %c0_9 = arith.constant 0 : index
      %21 = vector.load %arg6[%c0_8, %c0_9] : memref<8x256xf32, #tpu.memory_space<vmem>>, vector<8x256xf32>
      tpu.vector_store %arg6[%c0_8, %c0_9], %20 {strides = array<i32>} : memref<8x256xf32, #tpu.memory_space<vmem>>, vector<8x256xf32>,
      %c0_10 = arith.constant 0 : index
      %c0_11 = arith.constant 0 : index
      %22 = vector.load %arg7[%c0_10, %c0_11] : memref<8x14xi32, #tpu.memory_space<vmem>>, vector<8x14xi32>
      %23 = vector.broadcast %8 : i32 to vector<8x14xi32>
      %24 = arith.subi %22, %23 : vector<8x14xi32>
      %25 = tpu.iota {dimensions = array<i32: 1>} : vector<8x14xi32>
      %26 = tpu.iota {dimensions = array<i32: 1>} : vector<8x256xi32>
      %c0_i32_12 = arith.constant 0 : i32
      %cst = arith.constant 0xFF800000 : f32
      %c0_i32_13 = arith.constant 0 : i32
      %27 = arith.subi %4, %c0_i32_13 : i32
      %28 = arith.addi %c0_i32_13, %27 : i32
      %c1_i32 = arith.constant 1 : i32
      scf.for %arg9 = %c0_i32_13 to %28 step %c1_i32  : i32 {
        %29 = vector.broadcast %arg9 : i32 to vector<8x14xi32>
        %30 = arith.cmpi eq, %25, %29 : vector<8x14xi32>
        %c0_i32_14 = arith.constant 0 : i32
        %31 = vector.broadcast %c0_i32_14 : i32 to vector<8x14xi32>
        %32 = arith.select %30, %24, %31 : vector<8x14xi1>, vector<8x14xi32>
        %cst_15 = arith.constant dense<0> : vector<8xi32>
        %33 = vector.multi_reduction <add>, %32, %cst_15 [1] : vector<8x14xi32> to vector<8xi32>
        %34 = vector.shape_cast %33 : vector<8xi32> to vector<8x1xi32>
        %35 = vector.broadcast %34 : vector<8x1xi32> to vector<8x256xi32>
        %36 = arith.cmpi eq, %26, %35 : vector<8x256xi32>
        %c0_16 = arith.constant 0 : index
        %c0_17 = arith.constant 0 : index
        %37 = vector.load %arg6[%c0_16, %c0_17] : memref<8x256xf32, #tpu.memory_space<vmem>>, vector<8x256xf32>
        %38 = vector.broadcast %cst : f32 to vector<8x256xf32>
        %39 = arith.select %36, %38, %37 : vector<8x256xi1>, vector<8x256xf32>
        %c0_18 = arith.constant 0 : index
        %c0_19 = arith.constant 0 : index
        %40 = vector.load %arg6[%c0_18, %c0_19] : memref<8x256xf32, #tpu.memory_space<vmem>>, vector<8x256xf32>
        tpu.vector_store %arg6[%c0_18, %c0_19], %39 {strides = array<i32>} : memref<8x256xf32, #tpu.memory_space<vmem>>, vector<8x256xf32>,
      }
    } else {
    }
    %true = arith.constant true
    %17 = arith.xori %14, %true : i1
    %18 = arith.extui %17 : i1 to i32
    %c0_i32_5 = arith.constant 0 : i32
    %19 = arith.cmpi ne, %18, %c0_i32_5 : i32
    scf.if %19 {
      %c0_6 = arith.constant 0 : index
      %c0_7 = arith.constant 0 : index
      %20 = vector.load %arg5[%c0_6, %c0_7] : memref<8x256xf32, #tpu.memory_space<vmem>>, vector<8x256xf32>
      %c0_8 = arith.constant 0 : index
      %c0_9 = arith.constant 0 : index
      %21 = vector.load %arg6[%c0_8, %c0_9] : memref<8x256xf32, #tpu.memory_space<vmem>>, vector<8x256xf32>
      tpu.vector_store %arg6[%c0_8, %c0_9], %20 {strides = array<i32>} : memref<8x256xf32, #tpu.memory_space<vmem>>, vector<8x256xf32>,
    } else {
    }
    return
  }
  func.func @transform_0(%arg0: i32, %arg1: i32, %arg2: memref<1xi32, #tpu.memory_space<smem>>) -> (i32, i32) {
    %c0_i32 = arith.constant 0 : i32
    %c0_i32_0 = arith.constant 0 : i32
    return %arg0, %c0_i32 : i32, i32
  }
  func.func @transform_1(%arg0: i32, %arg1: i32, %arg2: memref<1xi32, #tpu.memory_space<smem>>) -> (i32, i32) {
    %c0_i32 = arith.constant 0 : i32
    %c0_i32_0 = arith.constant 0 : i32
    return %arg0, %c0_i32 : i32, i32
  }
  func.func @transform_2(%arg0: i32, %arg1: i32, %arg2: memref<1xi32, #tpu.memory_space<smem>>) -> (i32, i32) {
    %c0_i32 = arith.constant 0 : i32
    return %arg0, %arg1 : i32, i32
  }
  func.func @transform_3(%arg0: i32, %arg1: i32, %arg2: memref<1xi32, #tpu.memory_space<smem>>) -> (i32, i32) {
    %c0_i32 = arith.constant 0 : i32
    return %arg0, %arg1 : i32, i32
  }
}

</mosaic_0001>

<llo_original>
// kernel: tpu_custom_call.1
$region0: #{tpu_custom_call.1}
  #allocation0 [shape = 'u32[]', space=smem, size = 0x4, offset = 0x4, fixed_abs, tag = 'smem constant byte address 0x4 - core index']
  #allocation1 [shape = 'u32[144,128]{1,0:T(1,128)}', space=vmem, size = 0x12000, scoped, tag = 'internal scratch']
  #allocation2 [shape = 's32[8,14]{1,0:T(8,128)}', space=vmem, size = 0x1000, scoped, tag = 'scratch operand']
  #allocation3 [shape = 's32[2]{0:T(128)}', space=smem, size = 0x200, scoped, tag = 'scratch operand']
  #allocation4 [shape = 's32[1]{0}', space=sflag, size = 0x4, scoped, tag = 'scoped memory for tpu_custom_call.1']
  #allocation5 [shape = 's32[1]{0:T(128)S(6)}', space=smem, size = 0x200, scoped, tag = 'prefetched SMEM operand 0']
  %s0 = inlined_call_operand.<no memory space> [shape: s32[1], index: 0, kind: input, shape index: {}]
  %s1 = inlined_call_operand.vmem [shape: s32[16,2], index: 1, kind: input, shape index: {}]
  %s2 = inlined_call_operand.vmem [shape: s32[16,16], index: 2, kind: input, shape index: {}]
  %s3 = inlined_call_operand.hbm [shape: f32[16,1024], index: 3, kind: input, shape index: {}, may-alias: {3,4}]
  %s4 = inlined_call_operand.hbm [shape: f32[16,1024], index: 4, kind: output, shape index: {}, may-alias: {3,4}]
  %s5 = sld [smem:[#allocation0]]
  $region68: #{tpu_custom_call.1} parent=0
    _
  %s7 = ssub.s32 1, %s5
  %s8 = scalar_select 0, %s7, %s5
  %9 = sst [smem:[#allocation5]] %s0
  $region1: #{tpu_custom_call.1} parent=0
    #allocation6 [shape = 'u8[16384]{0}', space=vmem, size = 0x4000, scoped, tag = 'input window, operand 3']
    #allocation7 [shape = 's32[2]{0}', space=sflag, size = 0x8, scoped, tag = 'scoped memory for tpu_custom_call.1']
    #allocation8 [shape = 's32[2]{0}', space=sflag, size = 0x8, scoped, tag = 'scoped memory for tpu_custom_call.1']
    #allocation9 [shape = 'u8[16384]{0}', space=vmem, size = 0x4000, scoped, tag = 'output window, operand 0']
    %10 = vsyncpa [#allocation7], 0
    %s11 = scalar_lea.sflag [#allocation7], 1
    %12 = vsyncpa %s11, 0
    %13 = vsyncpa [#allocation8], 0
    %s14 = scalar_lea.sflag [#allocation8], 1
    %15 = vsyncpa %s14, 0
    loop: start=0, step=1, limit=10
    $region2: #{tpu_custom_call.1} parent=1 // loop_pre_header
      _
    $region3: #{tpu_custom_call.1} parent=1 // loop_header
      %s17 = sphi 0, %s21
      %p18 = scmp.ge.s32.totalorder %s17, 10
      %s24 = sphi 0, %s36
      %s25 = sphi 0, %s32
      %s26 = sphi 0, %s24
      %s27 = sphi 0, %s25
      %s28 = sphi 0, %s26
      %s29 = sphi 0, %s27
      %s39 = sphi 0, %s41
      %s42 = sphi 0, %s39
      %s43 = sphi 0, %s42
      %s59 = sphi 0, %s43
      %s65 = sphi 0, %s67
      %s68 = sphi 0, %s65
      %s69 = sphi 0, %s68
      %s85 = sphi 0, %s69
      %s93 = sphi 0, %s95
      %s96 = sphi 0, %s93
      %s97 = sphi 0, %s96
      %s113 = sphi 0, %s97
      %s121 = sphi 0, %s123
      %s124 = sphi 0, %s121
      %s125 = sphi 0, %s124
      %s141 = sphi 0, %s125
    $region4: #{tpu_custom_call.1} parent=1 // loop_header_branch
      %20 = sbr.rel (%p18) target = $region8
    $region5: #{tpu_custom_call.1} parent=1 // loop_body
      %s22 = ssub.s32 %s17, 1
      %s23 = ssub.s32 %s17, 2
      %s30 = sadd.s32 1, %s25
      %p31 = scmp.ge.s32.totalorder %s30, 4
      %s32 = scalar_select %p31, 0, %s30
      %s33 = sadd.s32 1, %s24
      %s34 = scalar_select %p31, %s33, %s24
      %p35 = scmp.ge.s32.totalorder %s34, 2
      %s36 = scalar_select %p35, 0, %s34
      %s37 = ssub.s32 %s24, %s36
      %p38 = scmp.eq.s32.totalorder %s37, 0
      %s40 = sadd.s32 %s39, 1
      %s41 = scalar_select %p38, %s39, %s40
      %p44 = pneg %p38
      %p45 = scmp.eq.s32.totalorder %s17, 7
      %p46 = por %p44, %p45
      %p47 = scmp.ne.s32.totalorder %s39, %s42
      %p48 = scmp.eq.s32.totalorder %s17, 0
      %p49 = por %p47, %p48
      %p50 = scmp.ne.s32.totalorder %s39, %s42
      %p51 = scmp.eq.s32.totalorder %s22, 7
      %p52 = por %p50, %p51
      %p53 = scmp.ne.s32.totalorder %s42, %s43
      %p54 = scmp.eq.s32.totalorder %s22, 0
      %p55 = por %p53, %p54
      %p56 = scmp.ne.s32.totalorder %s42, %s43
      %p57 = scmp.eq.s32.totalorder %s23, 7
      %p58 = por %p56, %p57
      %p60 = scmp.ne.s32.totalorder %s43, %s59
      %p61 = scmp.eq.s32.totalorder %s23, 0
      %p62 = por %p60, %p61
      %s63 = ssub.s32 %s24, %s36
      %p64 = scmp.eq.s32.totalorder %s63, 0
      %s66 = sadd.s32 %s65, 1
      %s67 = scalar_select %p64, %s65, %s66
      %p70 = pneg %p64
      %p71 = scmp.eq.s32.totalorder %s17, 7
      %p72 = por %p70, %p71
      %p73 = scmp.ne.s32.totalorder %s65, %s68
      %p74 = scmp.eq.s32.totalorder %s17, 0
      %p75 = por %p73, %p74
      %p76 = scmp.ne.s32.totalorder %s65, %s68
      %p77 = scmp.eq.s32.totalorder %s22, 7
      %p78 = por %p76, %p77
      %p79 = scmp.ne.s32.totalorder %s68, %s69
      %p80 = scmp.eq.s32.totalorder %s22, 0
      %p81 = por %p79, %p80
      %p82 = scmp.ne.s32.totalorder %s68, %s69
      %p83 = scmp.eq.s32.totalorder %s23, 7
      %p84 = por %p82, %p83
      %p86 = scmp.ne.s32.totalorder %s69, %s85
      %p87 = scmp.eq.s32.totalorder %s23, 0
      %p88 = por %p86, %p87
      %s89 = ssub.s32 %s24, %s36
      %s90 = ssub.s32 %s25, %s32
      %s91 = sor.u32 %s89, %s90
      %p92 = scmp.eq.s32.totalorder %s91, 0
      %s94 = sadd.s32 %s93, 1
      %s95 = scalar_select %p92, %s93, %s94
      %p98 = pneg %p92
      %p99 = scmp.eq.s32.totalorder %s17, 7
      %p100 = por %p98, %p99
      %p101 = scmp.ne.s32.totalorder %s93, %s96
      %p102 = scmp.eq.s32.totalorder %s17, 0
      %p103 = por %p101, %p102
      %p104 = scmp.ne.s32.totalorder %s93, %s96
      %p105 = scmp.eq.s32.totalorder %s22, 7
      %p106 = por %p104, %p105
      %p107 = scmp.ne.s32.totalorder %s96, %s97
      %p108 = scmp.eq.s32.totalorder %s22, 0
      %p109 = por %p107, %p108
      %p110 = scmp.ne.s32.totalorder %s96, %s97
      %p111 = scmp.eq.s32.totalorder %s23, 7
      %p112 = por %p110, %p111
      %p114 = scmp.ne.s32.totalorder %s97, %s113
      %p115 = scmp.eq.s32.totalorder %s23, 0
      %p116 = por %p114, %p115
      %s117 = ssub.s32 %s24, %s36
      %s118 = ssub.s32 %s25, %s32
      %s119 = sor.u32 %s117, %s118
      %p120 = scmp.eq.s32.totalorder %s119, 0
      %s122 = sadd.s32 %s121, 1
      %s123 = scalar_select %p120, %s121, %s122
      %p126 = pneg %p120
      %p127 = scmp.eq.s32.totalorder %s17, 7
      %p128 = por %p126, %p127
      %p129 = scmp.ne.s32.totalorder %s121, %s124
      %p130 = scmp.eq.s32.totalorder %s17, 0
      %p131 = por %p129, %p130
      %p132 = scmp.ne.s32.totalorder %s121, %s124
      %p133 = scmp.eq.s32.totalorder %s22, 7
      %p134 = por %p132, %p133
      %p135 = scmp.ne.s32.totalorder %s124, %s125
      %p136 = scmp.eq.s32.totalorder %s22, 0
      %p137 = por %p135, %p136
      %p138 = scmp.ne.s32.totalorder %s124, %s125
      %p139 = scmp.eq.s32.totalorder %s23, 7
      %p140 = por %p138, %p139
      %p142 = scmp.ne.s32.totalorder %s125, %s141
      %p143 = scmp.eq.s32.totalorder %s23, 0
      %p144 = por %p142, %p143
      %p145 = scmp.le.s32.totalorder 1, %s17
      %p146 = scmp.lt.s32.totalorder %s17, 9
      %p147 = pnand %p145, %p146
      %p148 = pneg %p147
      // Predicated region
      $region9: #{tpu_custom_call.1} parent=5 // pred_check
        _
      $region10: #{tpu_custom_call.1} parent=5 // pred_check_branch
        %150 = sbr.rel (%p147) target = $region12
      $region11: #{tpu_custom_call.1} parent=5 // pred_region
        %s151 = ssub.s32 %s17, 1
      $region12: #{tpu_custom_call.1} parent=5 // pred_fallthru
        _
      %p152 = scmp.lt.s32.totalorder %s17, 8
      // Predicated region
      $region13: #{tpu_custom_call.1} parent=5 // pred_check
        %p153 = pneg %p152
      $region14: #{tpu_custom_call.1} parent=5 // pred_check_branch
        %155 = sbr.rel (%p153) target = $region16
      $region15: #{tpu_custom_call.1} parent=5 // pred_region
        // Predicated region
        $region17: #{tpu_custom_call.1} parent=15 // pred_check
          %p156 = pneg %p49
        $region18: #{tpu_custom_call.1} parent=15 // pred_check_branch
          %158 = sbr.rel (%p156) target = $region20
        $region19: #{tpu_custom_call.1} parent=15 // pred_region
          %p159 = scmp.lt.s32.totalorder %s24, 1
          %s160 = scalar_select %p159, %s24, 1
          %s161 = smul.addr %s160, 8
          %s162 = scalar_lea.vmem %s1, %s161
        $region20: #{tpu_custom_call.1} parent=15 // pred_fallthru
          _
        // Predicated region
        $region21: #{tpu_custom_call.1} parent=15 // pred_check
          %p163 = pneg %p75
        $region22: #{tpu_custom_call.1} parent=15 // pred_check_branch
          %165 = sbr.rel (%p163) target = $region24
        $region23: #{tpu_custom_call.1} parent=15 // pred_region
          %p166 = scmp.lt.s32.totalorder %s24, 1
          %s167 = scalar_select %p166, %s24, 1
          %s168 = smul.addr %s167, 8
          %s169 = scalar_lea.vmem %s2, %s168
        $region24: #{tpu_custom_call.1} parent=15 // pred_fallthru
          _
        // Predicated region
        $region25: #{tpu_custom_call.1} parent=15 // pred_check
          %p170 = pneg %p103
        $region26: #{tpu_custom_call.1} parent=15 // pred_check_branch
          %172 = sbr.rel (%p170) target = $region28
        $region27: #{tpu_custom_call.1} parent=15 // pred_region
          %s173 = sand.u32 %s93, 1
          %s174 = scalar_lea.sflag [#allocation7], %s173
          %s175 = sand.u32 %s93, 1
          %s176 = smul.addr %s175, 16
          %s177 = scalar_lea.vmem [#allocation6], %s176
          %s178 = smul.u32 2, %s25
          %s180 = ssub.s32 256, 256
          %181 = vsyncadd %s174, %s180
          %s182 = smul.addr %s24, 8
          %s183 = sadd.s32 %s178, %s182
          %s184 = smul.addr %s183, 128
          %s185 = scalar_lea.hbm %s3, %s184
          %s187 = sshll.u32 %s177, 4
          %s188 = int_to_ptr.vmem [resolvable:$true] %s187
          %190 = dma.hbm_to_vmem [thread:$0]  %s185, 256, %s188, %s174
        $region28: #{tpu_custom_call.1} parent=15 // pred_fallthru
          _
      $region16: #{tpu_custom_call.1} parent=5 // pred_fallthru
        _
      %p191 = scmp.le.s32.totalorder 1, %s17
      %p192 = scmp.lt.s32.totalorder %s17, 9
      %p193 = pnand %p191, %p192
      %p194 = pneg %p193
      // Predicated region
      $region29: #{tpu_custom_call.1} parent=5 // pred_check
        _
      $region30: #{tpu_custom_call.1} parent=5 // pred_check_branch
        %196 = sbr.rel (%p193) target = $region32
      $region31: #{tpu_custom_call.1} parent=5 // pred_region
        %s197 = ssub.s32 %s17, 1
        %s198 = sand.u32 %s96, 1
        %s199 = scalar_lea.sflag [#allocation7], %s198
        %s200 = sand.u32 %s96, 1
        %s201 = smul.addr %s200, 16
        %s202 = scalar_lea.vmem [#allocation6], %s201
        // Predicated region
        $region33: #{tpu_custom_call.1} parent=31 // pred_check
          %p203 = pneg %p109
        $region34: #{tpu_custom_call.1} parent=31 // pred_check_branch
          %205 = sbr.rel (%p203) target = $region36
        $region35: #{tpu_custom_call.1} parent=31 // pred_region
          %206 = dma.done %s199, 256
        $region36: #{tpu_custom_call.1} parent=31 // pred_fallthru
          _
        %p207 = scmp.lt.s32.totalorder %s26, 1
        %s208 = scalar_select %p207, %s26, 1
        %s209 = smul.addr %s208, 8
        %s210 = scalar_lea.vmem %s1, %s209
        %p211 = pneg %p55
        %p212 = pneg %p52
        %p213 = scmp.lt.s32.totalorder %s26, 1
        %s214 = scalar_select %p213, %s26, 1
        %s215 = smul.addr %s214, 8
        %s216 = scalar_lea.vmem %s2, %s215
        %p217 = pneg %p81
        %p218 = pneg %p78
        %s219 = sand.u32 %s96, 1
        %s220 = scalar_lea.sflag [#allocation7], %s219
        %s221 = sand.u32 %s96, 1
        %s222 = smul.addr %s221, 16
        %s223 = scalar_lea.vmem [#allocation6], %s222
        %p224 = pneg %p109
        %p225 = pneg %p106
        %p226 = pneg %p137
        %p227 = pneg %p134
        %s228 = sand.u32 %s124, 1
        %s229 = scalar_lea.sflag [#allocation8], %s228
        %s230 = sand.u32 %s124, 1
        %s231 = smul.addr %s230, 16
        %s232 = scalar_lea.vmem [#allocation9], %s231
        %p233 = scmp.lt.s32.totalorder %s26, 1
        %s234 = scalar_select %p233, %s26, 1
        %s235 = smul.addr %s234, 8
        %s236 = scalar_lea.vmem %s1, %s235
        %p237 = scmp.lt.s32.totalorder %s26, 1
        %s238 = scalar_select %p237, %s26, 1
        %s239 = smul.addr %s238, 8
        %s240 = scalar_lea.vmem %s2, %s239
        %s241 = smul.u32 2, %s27
        %s242 = smul.u32 2, %s27
        %s243 = sld [smem:[#allocation5]]
        %s244 = sadd.s32 %s243, 4294967295
        %p245 = scmp.gt.s32.totalorder %s244, 0
        %s246 = scalar_select %p245, %s244, 0
        %p247 = scmp.lt.s32.totalorder %s246, 14
        %s248 = scalar_select %p247, %s246, 14
        %p249 = scmp.eq.s32.totalorder %s27, 0
        // Predicated region
        $region37: #{tpu_custom_call.1} parent=31 // pred_check
          %p250 = pneg %p249
        $region38: #{tpu_custom_call.1} parent=31 // pred_check_branch
          %252 = sbr.rel (%p250) target = $region40
        $region39: #{tpu_custom_call.1} parent=31 // pred_region
          %v253 = vld [vmem:[%s240] sm:$0xff]
          %v254 = vlaneseq
          %v255 = vand.u32 %v254, 127
          %v256 = vstv %s248
          %vm257 = vcmp.lt.s32.totalorder %v255, %v256
          %v258 = vld [vmem:[%s236] sm:$0xff]
          %259 = vset.pattern.permute.xlu0 0
          %260 = vperm.xlu0 %259, %v258
          %v261 = vpop.permute.xlu0 %260
          %vm262 = vcmp.eq.s32.totalorder %v253, %v261
          %vm263 = vmand %vm257, %vm262
          %264 = vset.pattern.permute.xlu0 1
          %265 = vperm.xlu0 %264, %v258
          %v266 = vpop.permute.xlu0 %265
          %vm267 = vcmp.eq.s32.totalorder %v253, %v266
          %v268 = vsel %vm267, 1, 0
          %269 = vrot.lane.b32.xlu0 %v268, 127
          %v270 = vpop.permute.xlu0 %269
          %vm271 = vcmp.ne.s32.totalorder %v270, 0
          %vm272 = vmand %vm263, %vm271
          %273 = vrot.lane.b32.xlu0 %v253, 126
          %v274 = vpop.permute.xlu0 %273
          %v275 = vsel %vm272, %v274, 4294967295
          %vm276 = vcmask 113664
          %277 = vst.msk [vmem:[#allocation2] sm:$0xff] %vm276, %v275
          %v278 = vsel %vm272, %v274, 1073741824
          %v279 = vsel %vm276, %v278, 2147483647
          %v280 = vand.u32 %v279, 65535
          %v281 = vshra.s32 %v279, 16
          %v282 = vcvt.s32.f32 %v280
          %v283 = vcvt.s32.f32 %v281
          %284 = vmin.xlane.f32.xlu0 %v283
          %v285 = vpop.xlane.xlu0 %284
          %vm286 = vcmp.eq.f32.partialorder %v283, %v285
          %v287 = vsel %vm286, %v282, inf
          %288 = vmin.xlane.f32.xlu0 %v287
          %v289 = vpop.xlane.xlu0 %288
          %v290 = vcvt.f32.s32 %v289
          %v291 = vcvt.f32.s32 %v285
          %v292 = vshll.u32 %v291, 16
          %v293 = vadd.s32 %v292, %v290
          %v294 = vrot.slane %v293, 4
          %vm295 = vcmp.lt.s32.totalorder %v293, %v294
          %v296 = vsel %vm295, %v293, %v294
          %v297 = vrot.slane %v296, 2
          %vm298 = vcmp.lt.s32.totalorder %v296, %v297
          %v299 = vsel %vm298, %v296, %v297
          %v300 = vrot.slane %v299, 1
          %vm301 = vcmp.lt.s32.totalorder %v299, %v300
          %v302 = vsel %vm301, %v299, %v300
          %s303 = vtos %v302
          %s304 = scalar_lea.smem [#allocation3], 0
          %305 = sst [smem:[%s304]] %s303
          %v306 = vsel %vm276, %v275, 2147483648
          %v307 = vand.u32 %v306, 65535
          %v308 = vshra.s32 %v306, 16
          %v309 = vcvt.s32.f32 %v307
          %v310 = vcvt.s32.f32 %v308
          %311 = vmax.xlane.f32.xlu0 %v310
          %v312 = vpop.xlane.xlu0 %311
          %vm313 = vcmp.eq.f32.partialorder %v310, %v312
          %v314 = vsel %vm313, %v309, -inf
          %315 = vmax.xlane.f32.xlu0 %v314
          %v316 = vpop.xlane.xlu0 %315
          %v317 = vcvt.f32.s32 %v316
          %v318 = vcvt.f32.s32 %v312
          %v319 = vshll.u32 %v318, 16
          %v320 = vadd.s32 %v319, %v317
          %v321 = vrot.slane %v320, 4
          %vm322 = vcmp.gt.s32.totalorder %v320, %v321
          %v323 = vsel %vm322, %v320, %v321
          %v324 = vrot.slane %v323, 2
          %vm325 = vcmp.gt.s32.totalorder %v323, %v324
          %v326 = vsel %vm325, %v323, %v324
          %v327 = vrot.slane %v326, 1
          %vm328 = vcmp.gt.s32.totalorder %v326, %v327
          %v329 = vsel %vm328, %v326, %v327
          %s330 = vtos %v329
          %s331 = scalar_lea.smem [#allocation3], 1
          %332 = sst [smem:[%s331]] %s330
        $region40: #{tpu_custom_call.1} parent=31 // pred_fallthru
          _
        %s333 = smul.u32 %s27, 256
        %s334 = sld [smem:[#allocation3]]
        %s335 = sld [smem:[#allocation3 + $0x1]]
        %p336 = scmp.ge.s32.totalorder %s335, %s333
        %s337 = sadd.s32 %s333, 256
        %p338 = scmp.lt.s32.totalorder %s334, %s337
        %p339 = pnand %p336, %p338
        %p340 = pneg %p339
        // Predicated region
        $region41: #{tpu_custom_call.1} parent=31 // pred_check
          _
        $region42: #{tpu_custom_call.1} parent=31 // pred_check_branch
          %342 = sbr.rel (%p339) target = $region44
        $region43: #{tpu_custom_call.1} parent=31 // pred_region
          %v343 = vld [vmem:[%s202] sm:$0xff]
          %v344 = vld [vmem:[%s202 + $0x8] sm:$0xff]
          %345 = vst [vmem:[%s232] sm:$0xff] %v343
          %346 = vst [vmem:[%s232 + $0x8] sm:$0xff] %v344
          %v347 = vld [vmem:[#allocation2] sm:$0xff]
          %v348 = vstv %s333
          %v349 = vsub.s32 %v347, %v348
          %v350 = vlaneseq
          %v351 = vand.u32 %v350, 127
          %v352 = vadd.s32 %v351, 128
          // While loop
          $region45: #{tpu_custom_call.1} parent=43 // loop_pre_header
            _
          $region46: #{tpu_custom_call.1} parent=43 // loop_header
            %s354 = sphi 0, %s356
            %p355 = scmp.ge.s32.totalorder %s354, %s248
          $region47: #{tpu_custom_call.1} parent=43 // loop_header_branch
            %358 = sbr.rel (%p355) target = $region51
          $region48: #{tpu_custom_call.1} parent=43 // loop_body
            %v359 = vstv %s354
            %vm360 = vcmp.eq.s32.totalorder %v351, %v359
            %v361 = vsel %vm360, %v349, 0
            %vm362 = vcmask 113664
            %v363 = vsel %vm362, %v361, 0
            %v364 = vand.u32 %v363, 65535
            %v365 = vshrl.u32 %v363, 16
            %v366 = vcvt.s32.f32 %v364
            %v367 = vcvt.s32.f32 %v365
            %368 = vadd.xlane.f32.xlu0 %v366
            %v369 = vpop.xlane.xlu0 %368
            %370 = vadd.xlane.f32.xlu0 %v367
            %v371 = vpop.xlane.xlu0 %370
            %v372 = vcvt.f32.s32 %v369
            %v373 = vcvt.f32.s32 %v371
            %v374 = vshll.u32 %v373, 16
            %v375 = vadd.s32 %v374, %v372
            %vm376 = vcmp.eq.s32.totalorder %v351, %v375
            %vm377 = vcmp.eq.s32.totalorder %v352, %v375
            %v378 = vld [vmem:[%s232] sm:$0xff]
            %v379 = vld [vmem:[%s232 + $0x8] sm:$0xff]
            %v380 = vsel %vm376, -inf, %v378
            %v381 = vsel %vm377, -inf, %v379
            %382 = vst [vmem:[%s232] sm:$0xff] %v380
            %383 = vst [vmem:[%s232 + $0x8] sm:$0xff] %v381
          $region49: #{tpu_custom_call.1} parent=43 // loop_footer
            %s356 = sadd.s32 %s354, 1
          $region50: #{tpu_custom_call.1} parent=43 // loop_footer_branch
            %353 = sbr.rel target = $region46
          $region51: #{tpu_custom_call.1} parent=43 // loop_exit
            _
        $region44: #{tpu_custom_call.1} parent=31 // pred_fallthru
          _
        %p384 = pneg %p340
        // Predicated region
        $region52: #{tpu_custom_call.1} parent=31 // pred_check
          _
        $region53: #{tpu_custom_call.1} parent=31 // pred_check_branch
          %386 = sbr.rel (%p340) target = $region55
        $region54: #{tpu_custom_call.1} parent=31 // pred_region
          %v387 = vld [vmem:[%s202] sm:$0xff]
          %v388 = vld [vmem:[%s202 + $0x8] sm:$0xff]
          %389 = vst [vmem:[%s232] sm:$0xff] %v387
          %390 = vst [vmem:[%s232 + $0x8] sm:$0xff] %v388
        $region55: #{tpu_custom_call.1} parent=31 // pred_fallthru
          _
        %s391 = sand.u32 %s124, 1
        %s392 = scalar_lea.sflag [#allocation8], %s391
        %s393 = sand.u32 %s124, 1
        %s394 = smul.addr %s393, 16
        %s395 = scalar_lea.vmem [#allocation9], %s394
        // Predicated region
        $region56: #{tpu_custom_call.1} parent=31 // pred_check
          %p396 = pneg %p134
        $region57: #{tpu_custom_call.1} parent=31 // pred_check_branch
          %398 = sbr.rel (%p396) target = $region59
        $region58: #{tpu_custom_call.1} parent=31 // pred_region
          %s399 = smul.u32 2, %s27
          %s401 = ssub.s32 256, 256
          %402 = vsyncadd %s392, %s401
          %s403 = smul.addr %s26, 8
          %s404 = sadd.s32 %s399, %s403
          %s405 = smul.addr %s404, 128
          %s406 = scalar_lea.hbm %s4, %s405
          %s408 = sshll.u32 %s395, 4
          %s409 = int_to_ptr.vmem [resolvable:$true] %s408
          %411 = dma.vmem_to_hbm [thread:$0]  %s409, 256, %s406, %s392
        $region59: #{tpu_custom_call.1} parent=31 // pred_fallthru
          _
      $region32: #{tpu_custom_call.1} parent=5 // pred_fallthru
        _
      %p412 = scmp.le.s32.totalorder 2, %s17
      // Predicated region
      $region60: #{tpu_custom_call.1} parent=5 // pred_check
        %p413 = pneg %p412
      $region61: #{tpu_custom_call.1} parent=5 // pred_check_branch
        %415 = sbr.rel (%p413) target = $region63
      $region62: #{tpu_custom_call.1} parent=5 // pred_region
        %s416 = ssub.s32 %s17, 2
        // Predicated region
        $region64: #{tpu_custom_call.1} parent=62 // pred_check
          %p417 = pneg %p140
        $region65: #{tpu_custom_call.1} parent=62 // pred_check_branch
          %419 = sbr.rel (%p417) target = $region67
        $region66: #{tpu_custom_call.1} parent=62 // pred_region
          %s420 = sand.u32 %s125, 1
          %s421 = scalar_lea.sflag [#allocation8], %s420
          %s422 = sand.u32 %s125, 1
          %s423 = smul.addr %s422, 16
          %s424 = scalar_lea.vmem [#allocation9], %s423
          %425 = dma.done %s421, 256
        $region67: #{tpu_custom_call.1} parent=62 // pred_fallthru
          _
      $region63: #{tpu_custom_call.1} parent=5 // pred_fallthru
        _
    $region6: #{tpu_custom_call.1} parent=1 // loop_footer
      %s21 = sadd.s32 1, %s17
    $region7: #{tpu_custom_call.1} parent=1 // loop_footer_branch
      %16 = sbr.rel target = $region3
    $region8: #{tpu_custom_call.1} parent=1 // loop_exit
      _
    %426 = vsyncpa [#allocation7], 1
    %s427 = scalar_lea.sflag [#allocation7], 1
    %428 = vsyncpa %s427, 1
    %429 = vsyncpa [#allocation8], 1
    %s430 = scalar_lea.sflag [#allocation8], 1
    %431 = vsyncpa %s430, 1

</llo_original>
